<compile_context>
chip_gen: v5e
topology: v5e:2x2
jax: 0.10.0
libtpu: 0.0.40
codegen_flags: <defaults>
</compile_context>

<pallas_src>
import functools

import jax
import jax.numpy as jnp
from jax import lax
from jax.experimental import pallas as pl
from jax.experimental.pallas import tpu as pltpu


def _make_divisible(v, divisor, min_value=None):
    if min_value is None:
        min_value = divisor
    new_v = max(min_value, int(v + divisor / 2) // divisor * divisor)
    if new_v < 0.9 * v:
        new_v += divisor
    return new_v


# ---------------------------------------------------------------------------
# Hardware introspection (generation-aware VMEM budget / megacore settings).
# ---------------------------------------------------------------------------
def _tpu_caps():
    kind = ""
    try:
        kind = (getattr(jax.devices()[0], "device_kind", "") or "").lower()
    except Exception:
        pass
    gen = None
    for g in (7, 6, 5, 4):
        if ("v%d" % g) in kind:
            gen = g
            break
    vmem_cap = None
    try:
        info = pltpu.get_tpu_info()
        vmem_cap = int(getattr(info, "vmem_capacity_bytes", 0)) or None
    except Exception:
        vmem_cap = None
    if vmem_cap is None:
        # v5e / v6e: 128 MiB per TC; v7x: 64 MiB per TC; unknown: conservative.
        vmem_cap = (128 << 20) if gen in (5, 6) else (64 << 20)
    return {
        "gen": gen,
        "vmem_cap": vmem_cap,
        # v7x has two TensorCores per chip; v5e / v6e have one.
        "two_cores": gen is not None and gen >= 7,
        # bf16 VALU exists on v6e / v7x; keep f32 elementwise path otherwise.
        "bf16_valu": gen is not None and gen >= 6,
    }


def _batch_dim_semantics(caps):
    if caps["two_cores"] and hasattr(pltpu, "CORE_PARALLEL"):
        # Actually splits the batch grid axis across both TensorCores on v7x.
        return pltpu.CORE_PARALLEL
    return "parallel"


def _pick_batch_block(n, per_image_bytes, budget_bytes, prefer_multi_step):
    """Largest divisor of n whose ~4 double-buffered in/out block copies fit
    the VMEM budget.  Returns None if even one image does not fit (caller
    falls back to the spatially tiled two-pass path)."""
    fits = [d for d in range(1, n + 1)
            if n % d == 0 and 4 * d * per_image_bytes <= budget_bytes]
    if not fits:
        return None
    if prefer_multi_step and any(n // d >= 2 for d in fits):
        fits = [d for d in fits if n // d >= 2]
    best = max(fits)
    mult8 = [d for d in fits if d % 8 == 0]
    if mult8 and 2 * max(mult8) >= best:
        best = max(mult8)  # sublane-friendly (Nb, C) / (Nb, Cr) matmul operands
    return best


def _pick_hw_tile(hw, c, itemsize, budget_bytes):
    """HW tile for the fallback path: a divisor of HW, lane-dense (multiple of
    128) when possible, fitting the double-buffered VMEM budget."""
    max_t = max(1, budget_bytes // (4 * max(c * itemsize, 1)))
    divs = [d for d in range(1, hw + 1) if hw % d == 0]
    fits = [d for d in divs if d <= max_t] or [1]
    lane_dense = [d for d in fits if d % 128 == 0]
    return max(lane_dense) if lane_dense else max(fits)


# ---------------------------------------------------------------------------
# Single-pass kernel: whole (Nb, C, HW) or (Nb, HW, C) slab resident in VMEM.
# ---------------------------------------------------------------------------
def _se_kernel(x_ref, w1t_ref, b1_ref, w2t_ref, b2_ref, o_ref, *,
               channels_last, gate_in_stream, vpu_excite):
    x = x_ref[...]                       # (Nb, C, HW) or (Nb, HW, C), stream dtype
    red_axis = 1 if channels_last else 2
    hw = x.shape[red_axis]

    # Squeeze: f32-accumulated mean over spatial.  No full-block f32 copy is
    # kept live across the excite matmuls (perf review item 1).
    s = jnp.sum(x, axis=red_axis, dtype=jnp.float32) * (1.0 / hw)   # (Nb, C)

    w1t = w1t_ref[...]                   # (C, Cr) f32
    w2t = w2t_ref[...]                   # (Cr, C) f32
    if vpu_excite:
        # Tiny C*Cr: broadcast multiply-add on the VPU, skip MXU push/pop.
        h = jnp.sum(s[:, :, None] * w1t[None, :, :], axis=1) + b1_ref[...]
        h = jnp.maximum(h, 0.0)
        g = jnp.sum(h[:, :, None] * w2t[None, :, :], axis=1) + b2_ref[...]
    else:
        h = jnp.dot(s, w1t, preferred_element_type=jnp.float32) + b1_ref[...]
        h = jnp.maximum(h, 0.0)
        g = jnp.dot(h, w2t, preferred_element_type=jnp.float32) + b2_ref[...]
    # hard_sigmoid: relu6(g + 3) / 6
    g = jnp.clip(g + 3.0, 0.0, 6.0) * (1.0 / 6.0)                   # (Nb, C) f32

    gexp = g[:, None, :] if channels_last else g[:, :, None]
    x = x_ref[...]  # second pass over the (still VMEM-resident) streamed block
    if gate_in_stream:
        o_ref[...] = (x * gexp.astype(x.dtype)).astype(o_ref.dtype)
    else:
        o_ref[...] = (x.astype(jnp.float32) * gexp).astype(o_ref.dtype)


def _se_single_pass(x3, w1t, b1, w2t, b2, *, channels_last, nb, caps, vmem_limit):
    n = x3.shape[0]
    if channels_last:
        _, hw, c = x3.shape
    else:
        _, c, hw = x3.shape
    cr = w1t.shape[1]
    itemsize = jnp.dtype(x3.dtype).itemsize
    grid = (n // nb,)

    gate_in_stream = (x3.dtype == jnp.float32) or bool(caps["bf16_valu"])
    vpu_excite = (c * cr) <= 1024
    batch_sem = _batch_dim_semantics(caps) if grid[0] >= 2 else "parallel"

    blk = (nb, hw, c) if channels_last else (nb, c, hw)
    cost = pl.CostEstimate(
        flops=2 * n * c * hw + 4 * n * c * cr,
        transcendentals=0,
        bytes_accessed=2 * n * c * hw * itemsize + (2 * c * cr + c + cr) * 4,
    )
    kern = functools.partial(_se_kernel, channels_last=channels_last,
                             gate_in_stream=gate_in_stream,
                             vpu_excite=vpu_excite)
    return pl.pallas_call(
        kern,
        out_shape=jax.ShapeDtypeStruct(x3.shape, x3.dtype),
        grid_spec=pltpu.PrefetchScalarGridSpec(
            num_scalar_prefetch=0,
            grid=grid,
            in_specs=[
                pl.BlockSpec(blk, lambda b: (b, 0, 0)),
                pl.BlockSpec((c, cr), lambda b: (0, 0)),
                pl.BlockSpec((1, cr), lambda b: (0, 0)),
                pl.BlockSpec((cr, c), lambda b: (0, 0)),
                pl.BlockSpec((1, c), lambda b: (0, 0)),
            ],
            out_specs=pl.BlockSpec(blk, lambda b: (b, 0, 0)),
        ),
        compiler_params=pltpu.CompilerParams(
            dimension_semantics=(batch_sem,),
            vmem_limit_bytes=vmem_limit),
        cost_estimate=cost,
    )(x3, w1t, b1, w2t, b2)


# ---------------------------------------------------------------------------
# Fallback: spatially tiled two-pass path for slabs that don't fit VMEM.
# ---------------------------------------------------------------------------
def _pool_tiled_kernel(x_ref, s_ref):
    # x: (1, C, T) stream dtype; s: (1, C, 1) f32 output used as accumulator.
    @pl.when(pl.program_id(1) == 0)
    def _():
        s_ref[...] = jnp.zeros_like(s_ref)
    s_ref[...] += jnp.sum(x_ref[...], axis=-1, keepdims=True, dtype=jnp.float32)


def _gate_tiled_kernel(x_ref, g_ref, o_ref, *, upcast):
    x = x_ref[...]            # (1, C, T)
    g = g_ref[...]            # (1, C, 1)
    if upcast:
        o_ref[...] = (x.astype(jnp.float32) * g).astype(o_ref.dtype)
    else:
        o_ref[...] = (x * g).astype(o_ref.dtype)


def _se_tiled(x3, w1t, b1, w2t, b2, *, budget, caps, vmem_limit):
    n, c, hw = x3.shape
    itemsize = jnp.dtype(x3.dtype).itemsize
    t = _pick_hw_tile(hw, c, itemsize, budget)
    nt = hw // t
    gate_in_stream = (x3.dtype == jnp.float32) or bool(caps["bf16_valu"])
    batch_sem = _batch_dim_semantics(caps) if n >= 2 else "parallel"
    cparams = pltpu.CompilerParams(
        dimension_semantics=(batch_sem, "arbitrary"),
        vmem_limit_bytes=vmem_limit)

    # Pass 1: per-image, per-channel spatial sums (output resident across t).
    pooled = pl.pallas_call(
        _pool_tiled_kernel,
        out_shape=jax.ShapeDtypeStruct((n, c, 1), jnp.float32),
        grid_spec=pltpu.PrefetchScalarGridSpec(
            num_scalar_prefetch=0,
            grid=(n, nt),
            in_specs=[pl.BlockSpec((1, c, t), lambda i, j: (i, 0, j))],
            out_specs=pl.BlockSpec((1, c, 1), lambda i, j: (i, 0, 0)),
        ),
        compiler_params=cparams,
        cost_estimate=pl.CostEstimate(
            flops=n * c * hw, transcendentals=0,
            bytes_accessed=n * c * hw * itemsize + n * c * 4),
    )(x3)

    # Excite on the tiny (N, C) pooled result: plain XLA ops, negligible cost.
    s = pooled[:, :, 0] * (1.0 / hw)
    hmid = jnp.maximum(jnp.dot(s, w1t, precision=lax.Precision.HIGHEST) + b1, 0.0)
    g = jnp.dot(hmid, w2t, precision=lax.Precision.HIGHEST) + b2
    g = jnp.clip(g + 3.0, 0.0, 6.0) * (1.0 / 6.0)
    g_dtype = x3.dtype if gate_in_stream else jnp.float32
    g3 = g.astype(g_dtype)[:, :, None]                              # (N, C, 1)

    # Pass 2: stream x again and apply the gate.
    return pl.pallas_call(
        functools.partial(_gate_tiled_kernel, upcast=not gate_in_stream),
        out_shape=jax.ShapeDtypeStruct((n, c, hw), x3.dtype),
        grid_spec=pltpu.PrefetchScalarGridSpec(
            num_scalar_prefetch=0,
            grid=(n, nt),
            in_specs=[pl.BlockSpec((1, c, t), lambda i, j: (i, 0, j)),
                      pl.BlockSpec((1, c, 1), lambda i, j: (i, 0, 0))],
            out_specs=pl.BlockSpec((1, c, t), lambda i, j: (i, 0, j)),
        ),
        compiler_params=cparams,
        cost_estimate=pl.CostEstimate(
            flops=n * c * hw, transcendentals=0,
            bytes_accessed=2 * n * c * hw * itemsize + n * c * 4),
    )(x3, g3)


# ---------------------------------------------------------------------------
# Public wrapper (NCHW, matching the PyTorch module).
# ---------------------------------------------------------------------------
def squeeze_excite(x_nchw, w_reduce, b_reduce, w_expand, b_expand,
                   *, vmem_budget_bytes=None):
    """SqueezeExcite forward.

    x_nchw:   (N, C, H, W), f32 or bf16 (streamed as-is; f32 accumulation).
    w_reduce: (Cr, C), b_reduce: (Cr,), w_expand: (C, Cr), b_expand: (C,).
    """
    n, c, h, w = x_nchw.shape
    cr = w_reduce.shape[0]
    hw = h * w
    itemsize = jnp.dtype(x_nchw.dtype).itemsize

    caps = _tpu_caps()
    # ~40% of VMEM for the ~4 double-buffered in/out block copies; the rest is
    # headroom for weights, pipeline overhead and compute temps.
    budget = (vmem_budget_bytes if vmem_budget_bytes is not None
              else int(0.40 * caps["vmem_cap"]))
    vmem_limit = min(int(0.75 * caps["vmem_cap"]), 128 << 20)

    # Pre-transpose weights so the kernel does (Nb,C)@(C,Cr) / (Nb,Cr)@(Cr,C).
    w1t = jnp.transpose(w_reduce).astype(jnp.float32)   # (C, Cr)
    w2t = jnp.transpose(w_expand).astype(jnp.float32)   # (Cr, C)
    b1 = b_reduce.reshape(1, cr).astype(jnp.float32)
    b2 = b_expand.reshape(1, c).astype(jnp.float32)

    x3 = x_nchw.reshape(n, c, hw)
    per_image_bytes = c * hw * itemsize
    nb = _pick_batch_block(n, per_image_bytes, budget,
                           prefer_multi_step=caps["two_cores"])

    if nb is None:
        # Single-image slab too big for VMEM: spatially tiled two-pass path.
        out3 = _se_tiled(x3, w1t, b1, w2t, b2, budget=budget, caps=caps,
                         vmem_limit=vmem_limit)
        return out3.reshape(n, c, h, w)

    # Lane-dense layout: real GhostNet SE stages have HW < 128 (7x7 / 14x14)
    # but C >= 128 — put channels on lanes there so stores are unmasked.
    channels_last = (hw < 128) and (c >= 128)
    if channels_last:
        # TODO(synk): NHWC callers should pass (N, HW, C) directly and skip
        # these two layout transposes.
        xl = jnp.transpose(x3, (0, 2, 1))                # (N, HW, C)
        out_l = _se_single_pass(xl, w1t, b1, w2t, b2, channels_last=True,
                                nb=nb, caps=caps, vmem_limit=vmem_limit)
        return jnp.transpose(out_l, (0, 2, 1)).reshape(n, c, h, w)

    out3 = _se_single_pass(x3, w1t, b1, w2t, b2, channels_last=False,
                           nb=nb, caps=caps, vmem_limit=vmem_limit)
    return out3.reshape(n, c, h, w)


# ---------------------------------------------------------------------------
# Pure-JAX reference (f32, highest precision) mirroring the PyTorch forward.
# ---------------------------------------------------------------------------
def _reference_se(x, w1, b1, w2, b2):
    x = x.astype(jnp.float32)
    s = jnp.mean(x, axis=(2, 3))                                     # (N, C)
    hmid = jnp.dot(s, w1.T.astype(jnp.float32),
                   precision=lax.Precision.HIGHEST) + b1
    hmid = jnp.maximum(hmid, 0.0)
    g = jnp.dot(hmid, w2.T.astype(jnp.float32),
                precision=lax.Precision.HIGHEST) + b2
    g = jnp.clip(g + 3.0, 0.0, 6.0) / 6.0
    return x * g[:, :, None, None]


if __name__ == "__main__":
    def make_case(key, n, c, h, w):
        cr = _make_divisible(c * 0.25, 4)
        kx, k1, k2, k3, k4 = jax.random.split(key, 5)
        x = jax.random.normal(kx, (n, c, h, w), dtype=jnp.float32)
        w1 = jax.random.normal(k1, (cr, c), dtype=jnp.float32) * 0.5
        b1 = jax.random.normal(k2, (cr,), dtype=jnp.float32) * 0.1
        w2 = jax.random.normal(k3, (c, cr), dtype=jnp.float32) * 0.5
        b2 = jax.random.normal(k4, (c,), dtype=jnp.float32) * 0.1
        return x, w1, b1, w2, b2

    keys = jax.random.split(jax.random.PRNGKey(0), 3)

    # 1) Module demo shape (in_chs=4, se_ratio=0.25, divisor=4 -> Cr=4), f32:
    #    batched single-pass, VPU excite path.
    x, w1, b1, w2, b2 = make_case(keys[0], 8, 4, 16, 16)
    out = jax.block_until_ready(squeeze_excite(x, w1, b1, w2, b2))
    ref = _reference_se(x, w1, b1, w2, b2)
    assert out.shape == x.shape and out.dtype == x.dtype
    assert jnp.allclose(out, ref, atol=1e-5, rtol=1e-5), "f32 mismatch"

    # 2) Same shape, bf16 streaming (f32 accumulation inside the kernel).
    xb = x.astype(jnp.bfloat16)
    out_b = jax.block_until_ready(squeeze_excite(xb, w1, b1, w2, b2))
    ref_b = _reference_se(xb, w1, b1, w2, b2)
    assert out_b.dtype == jnp.bfloat16
    assert jnp.allclose(out_b.astype(jnp.float32), ref_b, atol=3e-2, rtol=3e-2), \
        "bf16 mismatch"

    # 3) GhostNet-like late stage (C=128, 7x7): channels-on-lanes layout + MXU.
    x2, w1_2, b1_2, w2_2, b2_2 = make_case(keys[1], 2, 128, 7, 7)
    out2 = jax.block_until_ready(squeeze_excite(x2, w1_2, b1_2, w2_2, b2_2))
    ref2 = _reference_se(x2, w1_2, b1_2, w2_2, b2_2)
    assert out2.shape == x2.shape
    assert jnp.allclose(out2, ref2, atol=1e-2, rtol=1e-2), "channels-last mismatch"

    # 4) Force the spatially tiled two-pass fallback with a tiny VMEM budget.
    x3, w1_3, b1_3, w2_3, b2_3 = make_case(keys[2], 2, 8, 32, 32)
    out3 = jax.block_until_ready(
        squeeze_excite(x3, w1_3, b1_3, w2_3, b2_3, vmem_budget_bytes=16 * 1024))
    ref3 = _reference_se(x3, w1_3, b1_3, w2_3, b2_3)
    assert out3.shape == x3.shape
    assert jnp.allclose(out3, ref3, atol=1e-5, rtol=1e-5), "tiled-path mismatch"

    print("KERNEL_OK")
</pallas_src>

<mosaic_0001>
module attributes {stable_mosaic.version = 11 : i64} {
  func.func @_se_kernel(%arg0: i32, %arg1: memref<8x4x256xf32, #tpu.memory_space<vmem>>, %arg2: memref<4x4xf32, #tpu.memory_space<vmem>>, %arg3: memref<1x4xf32, #tpu.memory_space<vmem>>, %arg4: memref<4x4xf32, #tpu.memory_space<vmem>>, %arg5: memref<1x4xf32, #tpu.memory_space<vmem>>, %arg6: memref<8x4x256xf32, #tpu.memory_space<vmem>>) attributes {dimension_semantics = [#tpu.dimension_semantics<parallel>], iteration_bounds = array<i64: 1>, scalar_prefetch = 0 : i64, scratch_operands = 0 : i64, tpu.core_type = #tpu.core_type<tc>, window_params = [{transform_indices = @transform_0, window_bounds = array<i64: 8, 4, 256>}, {pipeline_mode = #tpu.pipeline_mode<synchronous>, transform_indices = @transform_1, window_bounds = array<i64: 4, 4>}, {pipeline_mode = #tpu.pipeline_mode<synchronous>, transform_indices = @transform_2, window_bounds = array<i64: 1, 4>}, {pipeline_mode = #tpu.pipeline_mode<synchronous>, transform_indices = @transform_3, window_bounds = array<i64: 4, 4>}, {pipeline_mode = #tpu.pipeline_mode<synchronous>, transform_indices = @transform_4, window_bounds = array<i64: 1, 4>}, {transform_indices = @transform_5, window_bounds = array<i64: 8, 4, 256>}]} {
    %c0 = arith.constant 0 : index
    %c0_0 = arith.constant 0 : index
    %c0_1 = arith.constant 0 : index
    %0 = vector.load %arg1[%c0, %c0_0, %c0_1] : memref<8x4x256xf32, #tpu.memory_space<vmem>>, vector<8x4x256xf32>
    %cst = arith.constant dense<0.000000e+00> : vector<8x4xf32>
    %1 = vector.multi_reduction <add>, %0, %cst [2] : vector<8x4x256xf32> to vector<8x4xf32>
    %cst_2 = arith.constant 3.906250e-03 : f32
    %2 = vector.broadcast %cst_2 : f32 to vector<8x4xf32>
    %3 = arith.mulf %1, %2 : vector<8x4xf32>
    %c0_3 = arith.constant 0 : index
    %c0_4 = arith.constant 0 : index
    %4 = vector.load %arg2[%c0_3, %c0_4] : memref<4x4xf32, #tpu.memory_space<vmem>>, vector<4x4xf32>
    %c0_5 = arith.constant 0 : index
    %c0_6 = arith.constant 0 : index
    %5 = vector.load %arg4[%c0_5, %c0_6] : memref<4x4xf32, #tpu.memory_space<vmem>>, vector<4x4xf32>
    %6 = vector.shape_cast %3 : vector<8x4xf32> to vector<8x4x1xf32>
    %7 = vector.shape_cast %4 : vector<4x4xf32> to vector<1x4x4xf32>
    %8 = vector.broadcast %6 : vector<8x4x1xf32> to vector<8x4x4xf32>
    %9 = vector.broadcast %7 : vector<1x4x4xf32> to vector<8x4x4xf32>
    %10 = arith.mulf %8, %9 : vector<8x4x4xf32>
    %cst_7 = arith.constant dense<0.000000e+00> : vector<8x4xf32>
    %11 = vector.multi_reduction <add>, %10, %cst_7 [1] : vector<8x4x4xf32> to vector<8x4xf32>
    %c0_8 = arith.constant 0 : index
    %c0_9 = arith.constant 0 : index
    %12 = vector.load %arg3[%c0_8, %c0_9] : memref<1x4xf32, #tpu.memory_space<vmem>>, vector<1x4xf32>
    %13 = vector.broadcast %12 : vector<1x4xf32> to vector<8x4xf32>
    %14 = arith.addf %11, %13 : vector<8x4xf32>
    %cst_10 = arith.constant 0.000000e+00 : f32
    %15 = vector.broadcast %cst_10 : f32 to vector<8x4xf32>
    %16 = arith.maximumf %14, %15 : vector<8x4xf32>
    %17 = vector.shape_cast %16 : vector<8x4xf32> to vector<8x4x1xf32>
    %18 = vector.shape_cast %5 : vector<4x4xf32> to vector<1x4x4xf32>
    %19 = vector.broadcast %17 : vector<8x4x1xf32> to vector<8x4x4xf32>
    %20 = vector.broadcast %18 : vector<1x4x4xf32> to vector<8x4x4xf32>
    %21 = arith.mulf %19, %20 : vector<8x4x4xf32>
    %cst_11 = arith.constant dense<0.000000e+00> : vector<8x4xf32>
    %22 = vector.multi_reduction <add>, %21, %cst_11 [1] : vector<8x4x4xf32> to vector<8x4xf32>
    %c0_12 = arith.constant 0 : index
    %c0_13 = arith.constant 0 : index
    %23 = vector.load %arg5[%c0_12, %c0_13] : memref<1x4xf32, #tpu.memory_space<vmem>>, vector<1x4xf32>
    %24 = vector.broadcast %23 : vector<1x4xf32> to vector<8x4xf32>
    %25 = arith.addf %22, %24 : vector<8x4xf32>
    %cst_14 = arith.constant 3.000000e+00 : f32
    %26 = vector.broadcast %cst_14 : f32 to vector<8x4xf32>
    %27 = arith.addf %25, %26 : vector<8x4xf32>
    %cst_15 = arith.constant 0.000000e+00 : f32
    %cst_16 = arith.constant 6.000000e+00 : f32
    %28 = vector.broadcast %cst_15 : f32 to vector<8x4xf32>
    %29 = arith.maximumf %28, %27 : vector<8x4xf32>
    %30 = vector.broadcast %cst_16 : f32 to vector<8x4xf32>
    %31 = arith.minimumf %30, %29 : vector<8x4xf32>
    %cst_17 = arith.constant 0.166666672 : f32
    %32 = vector.broadcast %cst_17 : f32 to vector<8x4xf32>
    %33 = arith.mulf %31, %32 : vector<8x4xf32>
    %34 = vector.shape_cast %33 : vector<8x4xf32> to vector<8x4x1xf32>
    %c0_18 = arith.constant 0 : index
    %c0_19 = arith.constant 0 : index
    %c0_20 = arith.constant 0 : index
    %35 = vector.load %arg1[%c0_18, %c0_19, %c0_20] : memref<8x4x256xf32, #tpu.memory_space<vmem>>, vector<8x4x256xf32>
    %36 = vector.broadcast %34 : vector<8x4x1xf32> to vector<8x4x256xf32>
    %37 = arith.mulf %35, %36 : vector<8x4x256xf32>
    %c0_21 = arith.constant 0 : index
    %c0_22 = arith.constant 0 : index
    %c0_23 = arith.constant 0 : index
    %38 = vector.load %arg6[%c0_21, %c0_22, %c0_23] : memref<8x4x256xf32, #tpu.memory_space<vmem>>, vector<8x4x256xf32>
    tpu.vector_store %arg6[%c0_21, %c0_22, %c0_23], %37 {strides = array<i32>} : memref<8x4x256xf32, #tpu.memory_space<vmem>>, vector<8x4x256xf32>,
    return
  }
  func.func @transform_0(%arg0: i32) -> (i32, i32, i32) {
    %c0_i32 = arith.constant 0 : i32
    %c0_i32_0 = arith.constant 0 : i32
    %c0_i32_1 = arith.constant 0 : i32
    return %arg0, %c0_i32, %c0_i32_0 : i32, i32, i32
  }
  func.func @transform_1(%arg0: i32) -> (i32, i32) {
    %c0_i32 = arith.constant 0 : i32
    %c0_i32_0 = arith.constant 0 : i32
    %c0_i32_1 = arith.constant 0 : i32
    return %c0_i32, %c0_i32_0 : i32, i32
  }
  func.func @transform_2(%arg0: i32) -> (i32, i32) {
    %c0_i32 = arith.constant 0 : i32
    %c0_i32_0 = arith.constant 0 : i32
    %c0_i32_1 = arith.constant 0 : i32
    return %c0_i32, %c0_i32_0 : i32, i32
  }
  func.func @transform_3(%arg0: i32) -> (i32, i32) {
    %c0_i32 = arith.constant 0 : i32
    %c0_i32_0 = arith.constant 0 : i32
    %c0_i32_1 = arith.constant 0 : i32
    return %c0_i32, %c0_i32_0 : i32, i32
  }
  func.func @transform_4(%arg0: i32) -> (i32, i32) {
    %c0_i32 = arith.constant 0 : i32
    %c0_i32_0 = arith.constant 0 : i32
    %c0_i32_1 = arith.constant 0 : i32
    return %c0_i32, %c0_i32_0 : i32, i32
  }
  func.func @transform_5(%arg0: i32) -> (i32, i32, i32) {
    %c0_i32 = arith.constant 0 : i32
    %c0_i32_0 = arith.constant 0 : i32
    %c0_i32_1 = arith.constant 0 : i32
    return %arg0, %c0_i32, %c0_i32_0 : i32, i32, i32
  }
}

</mosaic_0001>

<llo_original>
// kernel: tpu_custom_call.1
$region0: #{tpu_custom_call.1}
  #allocation0 [shape = 'u32[]', space=smem, size = 0x4, offset = 0x4, fixed_abs, tag = 'smem constant byte address 0x4 - core index']
  #allocation1 [shape = 'u32[72,128]{1,0:T(1,128)}', space=vmem, size = 0x9000, scoped, tag = 'internal scratch']
  %s0 = inlined_call_operand.hbm [shape: f32[8,4,256], index: 0, kind: input, shape index: {}]
  %s1 = inlined_call_operand.hbm [shape: f32[4,4], index: 1, kind: input, shape index: {}]
  %s2 = inlined_call_operand.vmem [shape: f32[1,4], index: 2, kind: input, shape index: {}]
  %s3 = inlined_call_operand.hbm [shape: f32[4,4], index: 3, kind: input, shape index: {}]
  %s4 = inlined_call_operand.vmem [shape: f32[1,4], index: 4, kind: input, shape index: {}]
  %s5 = inlined_call_operand.hbm [shape: f32[8,4,256], index: 5, kind: output, shape index: {}]
  %s6 = sld [smem:[#allocation0]]
  $region42: #{tpu_custom_call.1} parent=0
    _
  %s8 = ssub.s32 1, %s6
  %s9 = scalar_select 0, %s8, %s6
  $region1: #{tpu_custom_call.1} parent=0
    #allocation2 [shape = 'u8[32768]{0}', space=vmem, size = 0x8000, scoped, tag = 'input window, operand 0, single buffered']
    #allocation3 [shape = 's32[1]{0}', space=sflag, size = 0x4, scoped, tag = 'scoped memory for tpu_custom_call.1']
    #allocation4 [shape = 's32[1]{0}', space=sflag, size = 0x4, scoped, tag = 'scoped memory for tpu_custom_call.1']
    #allocation5 [shape = 'u8[2048]{0}', space=vmem, size = 0x800, scoped, tag = 'input window, operand 1, single buffered']
    #allocation6 [shape = 's32[1]{0}', space=sflag, size = 0x4, scoped, tag = 'scoped memory for tpu_custom_call.1']
    #allocation7 [shape = 'u8[2048]{0}', space=vmem, size = 0x800, scoped, tag = 'input window, operand 3, single buffered']
    #allocation8 [shape = 'u8[32768]{0}', space=vmem, size = 0x8000, scoped, tag = 'output window, operand 0, single buffered']
    %10 = vsyncpa [#allocation3], 0
    %11 = vsyncpa [#allocation6], 0
    %12 = vsyncpa [#allocation4], 0
    // Predicated region
    $region2: #{tpu_custom_call.1} parent=1 // pred_check
      _
    $region3: #{tpu_custom_call.1} parent=1 // pred_check_branch
      %14 = sbr.rel (0) target = $region5
    $region4: #{tpu_custom_call.1} parent=1 // pred_region
      %16 = vsyncadd [#allocation3], 0
      %s17 = sshll.u32 %s0, 4
      %s18 = int_to_ptr.hbm [resolvable:$true] %s17
      %s19 = sshll.u32 [#allocation2], 4
      %s20 = int_to_ptr.vmem [resolvable:$true] %s19
      %25 = dma.hbm_to_vmem [thread:$0]  %s18, 1024, %s20, [#allocation3], 128, 128, 8
    $region5: #{tpu_custom_call.1} parent=1 // pred_fallthru
      _
    // Predicated region
    $region6: #{tpu_custom_call.1} parent=1 // pred_check
      _
    $region7: #{tpu_custom_call.1} parent=1 // pred_check_branch
      %27 = sbr.rel (0) target = $region9
    $region8: #{tpu_custom_call.1} parent=1 // pred_region
      %29 = vsyncadd [#allocation6], 0
      %s31 = sshll.u32 %s1, 4
      %s32 = int_to_ptr.hbm [resolvable:$true] %s31
      %s33 = sshll.u32 [#allocation5], 4
      %s34 = int_to_ptr.vmem [resolvable:$true] %s33
      %36 = dma.hbm_to_vmem [thread:$0]  %s32, 64, %s34, [#allocation6]
    $region9: #{tpu_custom_call.1} parent=1 // pred_fallthru
      _
    // Predicated region
    $region10: #{tpu_custom_call.1} parent=1 // pred_check
      _
    $region11: #{tpu_custom_call.1} parent=1 // pred_check_branch
      %38 = sbr.rel (0) target = $region13
    $region12: #{tpu_custom_call.1} parent=1 // pred_region
      _
    $region13: #{tpu_custom_call.1} parent=1 // pred_fallthru
      _
    // Predicated region
    $region14: #{tpu_custom_call.1} parent=1 // pred_check
      _
    $region15: #{tpu_custom_call.1} parent=1 // pred_check_branch
      %40 = sbr.rel (0) target = $region17
    $region16: #{tpu_custom_call.1} parent=1 // pred_region
      %42 = vsyncadd [#allocation6], 0
      %s44 = sshll.u32 %s3, 4
      %s45 = int_to_ptr.hbm [resolvable:$true] %s44
      %s46 = sshll.u32 [#allocation7], 4
      %s47 = int_to_ptr.vmem [resolvable:$true] %s46
      %49 = dma.hbm_to_vmem [thread:$0]  %s45, 64, %s47, [#allocation6]
    $region17: #{tpu_custom_call.1} parent=1 // pred_fallthru
      _
    // Predicated region
    $region18: #{tpu_custom_call.1} parent=1 // pred_check
      _
    $region19: #{tpu_custom_call.1} parent=1 // pred_check_branch
      %51 = sbr.rel (0) target = $region21
    $region20: #{tpu_custom_call.1} parent=1 // pred_region
      _
    $region21: #{tpu_custom_call.1} parent=1 // pred_fallthru
      _
    // Predicated region
    $region22: #{tpu_custom_call.1} parent=1 // pred_check
      _
    $region23: #{tpu_custom_call.1} parent=1 // pred_check_branch
      %53 = sbr.rel (0) target = $region25
    $region24: #{tpu_custom_call.1} parent=1 // pred_region
      %55 = dma.done [#allocation3], 1024
    $region25: #{tpu_custom_call.1} parent=1 // pred_fallthru
      _
    // Predicated region
    $region26: #{tpu_custom_call.1} parent=1 // pred_check
      _
    $region27: #{tpu_custom_call.1} parent=1 // pred_check_branch
      %57 = sbr.rel (0) target = $region29
    $region28: #{tpu_custom_call.1} parent=1 // pred_region
      %59 = dma.done [#allocation6], 64
    $region29: #{tpu_custom_call.1} parent=1 // pred_fallthru
      _
    // Predicated region
    $region30: #{tpu_custom_call.1} parent=1 // pred_check
      _
    $region31: #{tpu_custom_call.1} parent=1 // pred_check_branch
      %61 = sbr.rel (0) target = $region33
    $region32: #{tpu_custom_call.1} parent=1 // pred_region
      %63 = dma.done [#allocation6], 64
    $region33: #{tpu_custom_call.1} parent=1 // pred_fallthru
      _
    %v64 = vld [vmem:[#allocation2] sm:$0xff]
    %v65 = vld [vmem:[#allocation2 + $0x8] sm:$0xff]
    %v66 = vld [vmem:[#allocation2 + $0x10] sm:$0xff]
    %v67 = vld [vmem:[#allocation2 + $0x18] sm:$0xff]
    %v68 = vld [vmem:[#allocation2 + $0x20] sm:$0xff]
    %v69 = vld [vmem:[#allocation2 + $0x28] sm:$0xff]
    %v70 = vld [vmem:[#allocation2 + $0x30] sm:$0xff]
    %v71 = vld [vmem:[#allocation2 + $0x38] sm:$0xff]
    %80 = vst [vmem:[#allocation1] ss:$2 sm:$0xff] %v64
    %v81 = vld.sshfl [vmem:[#allocation1] sm:$0xff pattern:$0x75316420]
    %v82 = vld.sshfl [vmem:[#allocation1 + $0x8] sm:$0xff pattern:$0x75316420]
    %s83 = scalar_lea.vmem [#allocation1], 16
    %84 = vst [vmem:[%s83] ss:$2 sm:$0xff] %v65
    %v85 = vld.sshfl [vmem:[#allocation1 + $0x10] sm:$0xff pattern:$0x75316420]
    %v86 = vld.sshfl [vmem:[#allocation1 + $0x18] sm:$0xff pattern:$0x75316420]
    %s87 = scalar_lea.vmem [#allocation1], 32
    %88 = vst [vmem:[%s87] ss:$2 sm:$0xff] %v66
    %v89 = vld.sshfl [vmem:[#allocation1 + $0x20] sm:$0xff pattern:$0x75316420]
    %v90 = vld.sshfl [vmem:[#allocation1 + $0x28] sm:$0xff pattern:$0x75316420]
    %s91 = scalar_lea.vmem [#allocation1], 48
    %92 = vst [vmem:[%s91] ss:$2 sm:$0xff] %v67
    %v93 = vld.sshfl [vmem:[#allocation1 + $0x30] sm:$0xff pattern:$0x75316420]
    %v94 = vld.sshfl [vmem:[#allocation1 + $0x38] sm:$0xff pattern:$0x75316420]
    %95 = vst [vmem:[#allocation1] ss:$2 sm:$0xff] %v68
    %v96 = vld.sshfl [vmem:[#allocation1] sm:$0xff pattern:$0x75316420]
    %v97 = vld.sshfl [vmem:[#allocation1 + $0x8] sm:$0xff pattern:$0x75316420]
    %98 = vst [vmem:[%s83] ss:$2 sm:$0xff] %v69
    %v99 = vld.sshfl [vmem:[#allocation1 + $0x10] sm:$0xff pattern:$0x75316420]
    %v100 = vld.sshfl [vmem:[#allocation1 + $0x18] sm:$0xff pattern:$0x75316420]
    %101 = vst [vmem:[%s87] ss:$2 sm:$0xff] %v70
    %v102 = vld.sshfl [vmem:[#allocation1 + $0x20] sm:$0xff pattern:$0x75316420]
    %v103 = vld.sshfl [vmem:[#allocation1 + $0x28] sm:$0xff pattern:$0x75316420]
    %104 = vst [vmem:[%s91] ss:$2 sm:$0xff] %v71
    %v105 = vld.sshfl [vmem:[#allocation1 + $0x30] sm:$0xff pattern:$0x75316420]
    %v106 = vld.sshfl [vmem:[#allocation1 + $0x38] sm:$0xff pattern:$0x75316420]
    %vm123 = vcmask 1043456
    %v124 = vsel %vm123, %v81, 0.0
    %v125 = vsel %vm123, %v82, 0.0
    %v126 = vadd.f32 %v124, %v125
    %127 = vadd.xlane.f32.xlu0 %v126
    %v128 = vpop.xlane.xlu0 %127
    %v129 = vsel %vm123, %v85, 0.0
    %v130 = vsel %vm123, %v86, 0.0
    %v131 = vadd.f32 %v129, %v130
    %132 = vadd.xlane.f32.xlu0 %v131
    %v133 = vpop.xlane.xlu0 %132
    %v134 = vsel %vm123, %v89, 0.0
    %v135 = vsel %vm123, %v90, 0.0
    %v136 = vadd.f32 %v134, %v135
    %137 = vadd.xlane.f32.xlu0 %v136
    %v138 = vpop.xlane.xlu0 %137
    %v139 = vsel %vm123, %v93, 0.0
    %v140 = vsel %vm123, %v94, 0.0
    %v141 = vadd.f32 %v139, %v140
    %142 = vadd.xlane.f32.xlu0 %v141
    %v143 = vpop.xlane.xlu0 %142
    %v144 = vsel %vm123, %v96, 0.0
    %v145 = vsel %vm123, %v97, 0.0
    %v146 = vadd.f32 %v144, %v145
    %147 = vadd.xlane.f32.xlu0 %v146
    %v148 = vpop.xlane.xlu0 %147
    %v149 = vsel %vm123, %v99, 0.0
    %v150 = vsel %vm123, %v100, 0.0
    %v151 = vadd.f32 %v149, %v150
    %152 = vadd.xlane.f32.xlu0 %v151
    %v153 = vpop.xlane.xlu0 %152
    %v154 = vsel %vm123, %v102, 0.0
    %v155 = vsel %vm123, %v103, 0.0
    %v156 = vadd.f32 %v154, %v155
    %157 = vadd.xlane.f32.xlu0 %v156
    %v158 = vpop.xlane.xlu0 %157
    %v159 = vsel %vm123, %v105, 0.0
    %v160 = vsel %vm123, %v106, 0.0
    %v161 = vadd.f32 %v159, %v160
    %162 = vadd.xlane.f32.xlu0 %v161
    %v163 = vpop.xlane.xlu0 %162
    %v164 = vmul.f32 %v128, 0.00390625
    %v165 = vmul.f32 %v133, 0.00390625
    %v166 = vmul.f32 %v138, 0.00390625
    %v167 = vmul.f32 %v143, 0.00390625
    %v168 = vmul.f32 %v148, 0.00390625
    %v169 = vmul.f32 %v153, 0.00390625
    %v170 = vmul.f32 %v158, 0.00390625
    %v171 = vmul.f32 %v163, 0.00390625
    %v172 = vld [vmem:[#allocation5] sm:$0xf]
    %v173 = vld [vmem:[#allocation7] sm:$0xf]
    %v174 = vmul.f32 %v164, %v172
    %v175 = vmul.f32 %v165, %v172
    %v176 = vmul.f32 %v166, %v172
    %v177 = vmul.f32 %v167, %v172
    %v178 = vmul.f32 %v168, %v172
    %v179 = vmul.f32 %v169, %v172
    %v180 = vmul.f32 %v170, %v172
    %v181 = vmul.f32 %v171, %v172
    %vm182 = vcmask 27648
    %v183 = vsel %vm182, %v174, 0.0
    %v184 = vrot.slane %v183, 4
    %v185 = vadd.f32 %v183, %v184
    %v186 = vrot.slane %v185, 2
    %v187 = vadd.f32 %v185, %v186
    %v188 = vrot.slane %v187, 1
    %v189 = vadd.f32 %v187, %v188
    %v190 = vsel %vm182, %v175, 0.0
    %v191 = vrot.slane %v190, 4
    %v192 = vadd.f32 %v190, %v191
    %v193 = vrot.slane %v192, 2
    %v194 = vadd.f32 %v192, %v193
    %v195 = vrot.slane %v194, 1
    %v196 = vadd.f32 %v194, %v195
    %v197 = vsel %vm182, %v176, 0.0
    %v198 = vrot.slane %v197, 4
    %v199 = vadd.f32 %v197, %v198
    %v200 = vrot.slane %v199, 2
    %v201 = vadd.f32 %v199, %v200
    %v202 = vrot.slane %v201, 1
    %v203 = vadd.f32 %v201, %v202
    %v204 = vsel %vm182, %v177, 0.0
    %v205 = vrot.slane %v204, 4
    %v206 = vadd.f32 %v204, %v205
    %v207 = vrot.slane %v206, 2
    %v208 = vadd.f32 %v206, %v207
    %v209 = vrot.slane %v208, 1
    %v210 = vadd.f32 %v208, %v209
    %v211 = vsel %vm182, %v178, 0.0
    %v212 = vrot.slane %v211, 4
    %v213 = vadd.f32 %v211, %v212
    %v214 = vrot.slane %v213, 2
    %v215 = vadd.f32 %v213, %v214
    %v216 = vrot.slane %v215, 1
    %v217 = vadd.f32 %v215, %v216
    %v218 = vsel %vm182, %v179, 0.0
    %v219 = vrot.slane %v218, 4
    %v220 = vadd.f32 %v218, %v219
    %v221 = vrot.slane %v220, 2
    %v222 = vadd.f32 %v220, %v221
    %v223 = vrot.slane %v222, 1
    %v224 = vadd.f32 %v222, %v223
    %v225 = vsel %vm182, %v180, 0.0
    %v226 = vrot.slane %v225, 4
    %v227 = vadd.f32 %v225, %v226
    %v228 = vrot.slane %v227, 2
    %v229 = vadd.f32 %v227, %v228
    %v230 = vrot.slane %v229, 1
    %v231 = vadd.f32 %v229, %v230
    %v232 = vsel %vm182, %v181, 0.0
    %v233 = vrot.slane %v232, 4
    %v234 = vadd.f32 %v232, %v233
    %v235 = vrot.slane %v234, 2
    %v236 = vadd.f32 %v234, %v235
    %v237 = vrot.slane %v236, 1
    %v238 = vadd.f32 %v236, %v237
    %v239 = vld [vmem:[%s2] sm:$0x1]
    %v241 = vperm.slane %v239, 0
    %v243 = vadd.f32 %v189, %v241
    %v244 = vadd.f32 %v196, %v241
    %v245 = vadd.f32 %v203, %v241
    %v246 = vadd.f32 %v210, %v241
    %v247 = vadd.f32 %v217, %v241
    %v248 = vadd.f32 %v224, %v241
    %v249 = vadd.f32 %v231, %v241
    %v250 = vadd.f32 %v238, %v241
    %v251 = vmax.f32 %v243, 0.0
    %v252 = vmax.f32 %v244, 0.0
    %v253 = vmax.f32 %v245, 0.0
    %v254 = vmax.f32 %v246, 0.0
    %v255 = vmax.f32 %v247, 0.0
    %v256 = vmax.f32 %v248, 0.0
    %v257 = vmax.f32 %v249, 0.0
    %v258 = vmax.f32 %v250, 0.0
    %v259 = vperm.slane %v251, 0
    %v260 = vlaneseq
    %v261 = vshrl.u32 %v260, 7
    %263 = vset.pattern.permute.xlu0 %v261
    %264 = vperm.xlu0 %263, %v259
    %v265 = vpop.permute.xlu0 %264
    %v266 = vperm.slane %v252, 0
    %v267 = vlaneseq
    %v268 = vshrl.u32 %v267, 7
    %270 = vset.pattern.permute.xlu0 %v268
    %271 = vperm.xlu0 %270, %v266
    %v272 = vpop.permute.xlu0 %271
    %v273 = vperm.slane %v253, 0
    %v274 = vlaneseq
    %v275 = vshrl.u32 %v274, 7
    %277 = vset.pattern.permute.xlu0 %v275
    %278 = vperm.xlu0 %277, %v273
    %v279 = vpop.permute.xlu0 %278
    %v280 = vperm.slane %v254, 0
    %v281 = vlaneseq
    %v282 = vshrl.u32 %v281, 7
    %284 = vset.pattern.permute.xlu0 %v282
    %285 = vperm.xlu0 %284, %v280
    %v286 = vpop.permute.xlu0 %285
    %v287 = vperm.slane %v255, 0
    %v288 = vlaneseq
    %v289 = vshrl.u32 %v288, 7
    %291 = vset.pattern.permute.xlu0 %v289
    %292 = vperm.xlu0 %291, %v287
    %v293 = vpop.permute.xlu0 %292
    %v294 = vperm.slane %v256, 0
    %v295 = vlaneseq
    %v296 = vshrl.u32 %v295, 7
    %298 = vset.pattern.permute.xlu0 %v296
    %299 = vperm.xlu0 %298, %v294
    %v300 = vpop.permute.xlu0 %299
    %v301 = vperm.slane %v257, 0
    %v302 = vlaneseq
    %v303 = vshrl.u32 %v302, 7
    %305 = vset.pattern.permute.xlu0 %v303
    %306 = vperm.xlu0 %305, %v301
    %v307 = vpop.permute.xlu0 %306
    %v308 = vperm.slane %v258, 0
    %v309 = vlaneseq
    %v310 = vshrl.u32 %v309, 7
    %312 = vset.pattern.permute.xlu0 %v310
    %313 = vperm.xlu0 %312, %v308
    %v314 = vpop.permute.xlu0 %313
    %v315 = vmul.f32 %v265, %v173
    %v316 = vmul.f32 %v272, %v173
    %v317 = vmul.f32 %v279, %v173
    %v318 = vmul.f32 %v286, %v173
    %v319 = vmul.f32 %v293, %v173
    %v320 = vmul.f32 %v300, %v173
    %v321 = vmul.f32 %v307, %v173
    %v322 = vmul.f32 %v314, %v173
    %v323 = vsel %vm182, %v315, 0.0
    %v324 = vrot.slane %v323, 4
    %v325 = vadd.f32 %v323, %v324
    %v326 = vrot.slane %v325, 2
    %v327 = vadd.f32 %v325, %v326
    %v328 = vrot.slane %v327, 1
    %v329 = vadd.f32 %v327, %v328
    %v330 = vsel %vm182, %v316, 0.0
    %v331 = vrot.slane %v330, 4
    %v332 = vadd.f32 %v330, %v331
    %v333 = vrot.slane %v332, 2
    %v334 = vadd.f32 %v332, %v333
    %v335 = vrot.slane %v334, 1
    %v336 = vadd.f32 %v334, %v335
    %v337 = vsel %vm182, %v317, 0.0
    %v338 = vrot.slane %v337, 4
    %v339 = vadd.f32 %v337, %v338
    %v340 = vrot.slane %v339, 2
    %v341 = vadd.f32 %v339, %v340
    %v342 = vrot.slane %v341, 1
    %v343 = vadd.f32 %v341, %v342
    %v344 = vsel %vm182, %v318, 0.0
    %v345 = vrot.slane %v344, 4
    %v346 = vadd.f32 %v344, %v345
    %v347 = vrot.slane %v346, 2
    %v348 = vadd.f32 %v346, %v347
    %v349 = vrot.slane %v348, 1
    %v350 = vadd.f32 %v348, %v349
    %v351 = vsel %vm182, %v319, 0.0
    %v352 = vrot.slane %v351, 4
    %v353 = vadd.f32 %v351, %v352
    %v354 = vrot.slane %v353, 2
    %v355 = vadd.f32 %v353, %v354
    %v356 = vrot.slane %v355, 1
    %v357 = vadd.f32 %v355, %v356
    %v358 = vsel %vm182, %v320, 0.0
    %v359 = vrot.slane %v358, 4
    %v360 = vadd.f32 %v358, %v359
    %v361 = vrot.slane %v360, 2
    %v362 = vadd.f32 %v360, %v361
    %v363 = vrot.slane %v362, 1
    %v364 = vadd.f32 %v362, %v363
    %v365 = vsel %vm182, %v321, 0.0
    %v366 = vrot.slane %v365, 4
    %v367 = vadd.f32 %v365, %v366
    %v368 = vrot.slane %v367, 2
    %v369 = vadd.f32 %v367, %v368
    %v370 = vrot.slane %v369, 1
    %v371 = vadd.f32 %v369, %v370
    %v372 = vsel %vm182, %v322, 0.0
    %v373 = vrot.slane %v372, 4
    %v374 = vadd.f32 %v372, %v373
    %v375 = vrot.slane %v374, 2
    %v376 = vadd.f32 %v374, %v375
    %v377 = vrot.slane %v376, 1
    %v378 = vadd.f32 %v376, %v377
    %v379 = vld [vmem:[%s4] sm:$0x1]
    %v381 = vperm.slane %v379, 0
    %v383 = vadd.f32 %v329, %v381
    %v384 = vadd.f32 %v336, %v381
    %v385 = vadd.f32 %v343, %v381
    %v386 = vadd.f32 %v350, %v381
    %v387 = vadd.f32 %v357, %v381
    %v388 = vadd.f32 %v364, %v381
    %v389 = vadd.f32 %v371, %v381
    %v390 = vadd.f32 %v378, %v381
    %v391 = vadd.f32 %v383, 3.0
    %v392 = vadd.f32 %v384, 3.0
    %v393 = vadd.f32 %v385, 3.0
    %v394 = vadd.f32 %v386, 3.0
    %v395 = vadd.f32 %v387, 3.0
    %v396 = vadd.f32 %v388, 3.0
    %v397 = vadd.f32 %v389, 3.0
    %v398 = vadd.f32 %v390, 3.0
    %v399 = vmax.f32 %v391, 0.0
    %v400 = vmax.f32 %v392, 0.0
    %v401 = vmax.f32 %v393, 0.0
    %v402 = vmax.f32 %v394, 0.0
    %v403 = vmax.f32 %v395, 0.0
    %v404 = vmax.f32 %v396, 0.0
    %v405 = vmax.f32 %v397, 0.0
    %v406 = vmax.f32 %v398, 0.0
    %v407 = vmin.f32 %v399, 6.0
    %v408 = vmin.f32 %v400, 6.0
    %v409 = vmin.f32 %v401, 6.0
    %v410 = vmin.f32 %v402, 6.0
    %v411 = vmin.f32 %v403, 6.0
    %v412 = vmin.f32 %v404, 6.0
    %v413 = vmin.f32 %v405, 6.0
    %v414 = vmin.f32 %v406, 6.0
    %v415 = vmul.f32 %v407, 0.16666667
    %v416 = vmul.f32 %v408, 0.16666667
    %v417 = vmul.f32 %v409, 0.16666667
    %v418 = vmul.f32 %v410, 0.16666667
    %v419 = vmul.f32 %v411, 0.16666667
    %v420 = vmul.f32 %v412, 0.16666667
    %v421 = vmul.f32 %v413, 0.16666667
    %v422 = vmul.f32 %v414, 0.16666667
    %v423 = vperm.slane %v415, 0
    %v424 = vlaneseq
    %v425 = vshrl.u32 %v424, 7
    %427 = vset.pattern.permute.xlu0 %v425
    %428 = vperm.xlu0 %427, %v423
    %v429 = vpop.permute.xlu0 %428
    %v430 = vperm.slane %v416, 0
    %v431 = vlaneseq
    %v432 = vshrl.u32 %v431, 7
    %434 = vset.pattern.permute.xlu0 %v432
    %435 = vperm.xlu0 %434, %v430
    %v436 = vpop.permute.xlu0 %435
    %v437 = vperm.slane %v417, 0
    %v438 = vlaneseq
    %v439 = vshrl.u32 %v438, 7
    %441 = vset.pattern.permute.xlu0 %v439
    %442 = vperm.xlu0 %441, %v437
    %v443 = vpop.permute.xlu0 %442
    %v444 = vperm.slane %v418, 0
    %v445 = vlaneseq
    %v446 = vshrl.u32 %v445, 7
    %448 = vset.pattern.permute.xlu0 %v446
    %449 = vperm.xlu0 %448, %v444
    %v450 = vpop.permute.xlu0 %449
    %v451 = vperm.slane %v419, 0
    %v452 = vlaneseq
    %v453 = vshrl.u32 %v452, 7
    %455 = vset.pattern.permute.xlu0 %v453
    %456 = vperm.xlu0 %455, %v451
    %v457 = vpop.permute.xlu0 %456
    %v458 = vperm.slane %v420, 0
    %v459 = vlaneseq
    %v460 = vshrl.u32 %v459, 7
    %462 = vset.pattern.permute.xlu0 %v460
    %463 = vperm.xlu0 %462, %v458
    %v464 = vpop.permute.xlu0 %463
    %v465 = vperm.slane %v421, 0
    %v466 = vlaneseq
    %v467 = vshrl.u32 %v466, 7
    %469 = vset.pattern.permute.xlu0 %v467
    %470 = vperm.xlu0 %469, %v465
    %v471 = vpop.permute.xlu0 %470
    %v472 = vperm.slane %v422, 0
    %v473 = vlaneseq
    %v474 = vshrl.u32 %v473, 7
    %476 = vset.pattern.permute.xlu0 %v474
    %477 = vperm.xlu0 %476, %v472
    %v478 = vpop.permute.xlu0 %477
    %v488 = vunpack.c.l.s4 839922192
    %v489 = vunpack.c.0.s8 %v488
    %v490 = vperm.slane %v429, %v489
    %v492 = vunpack.c.l.s4 839922192
    %v493 = vunpack.c.0.s8 %v492
    %v494 = vperm.slane %v436, %v493
    %v496 = vunpack.c.l.s4 839922192
    %v497 = vunpack.c.0.s8 %v496
    %v498 = vperm.slane %v443, %v497
    %v500 = vunpack.c.l.s4 839922192
    %v501 = vunpack.c.0.s8 %v500
    %v502 = vperm.slane %v450, %v501
    %v504 = vunpack.c.l.s4 839922192
    %v505 = vunpack.c.0.s8 %v504
    %v506 = vperm.slane %v457, %v505
    %v508 = vunpack.c.l.s4 839922192
    %v509 = vunpack.c.0.s8 %v508
    %v510 = vperm.slane %v464, %v509
    %v512 = vunpack.c.l.s4 839922192
    %v513 = vunpack.c.0.s8 %v512
    %v514 = vperm.slane %v471, %v513
    %v516 = vunpack.c.l.s4 839922192
    %v517 = vunpack.c.0.s8 %v516
    %v518 = vperm.slane %v478, %v517
    %v527 = vmul.f32 %v64, %v490
    %v528 = vmul.f32 %v65, %v494
    %v529 = vmul.f32 %v66, %v498
    %v530 = vmul.f32 %v67, %v502
    %v531 = vmul.f32 %v68, %v506
    %v532 = vmul.f32 %v69, %v510
    %v533 = vmul.f32 %v70, %v514
    %v534 = vmul.f32 %v71, %v518
    %535 = vst [vmem:[#allocation8] sm:$0xff] %v527
    %536 = vst [vmem:[#allocation8 + $0x8] sm:$0xff] %v528
    %537 = vst [vmem:[#allocation8 + $0x10] sm:$0xff] %v529
    %538 = vst [vmem:[#allocation8 + $0x18] sm:$0xff] %v530
    %539 = vst [vmem:[#allocation8 + $0x20] sm:$0xff] %v531
    %540 = vst [vmem:[#allocation8 + $0x28] sm:$0xff] %v532
    %541 = vst [vmem:[#allocation8 + $0x30] sm:$0xff] %v533
    %542 = vst [vmem:[#allocation8 + $0x38] sm:$0xff] %v534
    // Predicated region
    $region34: #{tpu_custom_call.1} parent=1 // pred_check
      _
    $region35: #{tpu_custom_call.1} parent=1 // pred_check_branch
      %544 = sbr.rel (0) target = $region37
    $region36: #{tpu_custom_call.1} parent=1 // pred_region
      %546 = vsyncadd [#allocation4], 0
      %s547 = sshll.u32 [#allocation8], 4
      %s548 = int_to_ptr.vmem [resolvable:$true] %s547
      %s549 = sshll.u32 %s5, 4
      %s550 = int_to_ptr.hbm [resolvable:$true] %s549
      %555 = dma.vmem_to_hbm [thread:$0]  %s548, 1024, %s550, [#allocation4], 128, 128, 8
    $region37: #{tpu_custom_call.1} parent=1 // pred_fallthru
      _
    // Predicated region
    $region38: #{tpu_custom_call.1} parent=1 // pred_check
      _
    $region39: #{tpu_custom_call.1} parent=1 // pred_check_branch
      %557 = sbr.rel (0) target = $region41
    $region40: #{tpu_custom_call.1} parent=1 // pred_region
      %559 = dma.done [#allocation4], 1024
    $region41: #{tpu_custom_call.1} parent=1 // pred_fallthru
      _
    %560 = vsyncpa [#allocation3], 1
    %561 = vsyncpa [#allocation6], 1
    %562 = vsyncpa [#allocation4], 1

</llo_original>
